<compile_context>
chip_gen: v5e
topology: v5e:2x2
jax: 0.10.0
libtpu: 0.0.40
codegen_flags: <defaults>
</compile_context>

<pallas_src>
import functools
import math

import jax
import jax.numpy as jnp
from jax.experimental import pallas as pl
from jax.experimental.pallas import tpu as pltpu


def _dice_partial_kernel(p_ref, t_ref, inter_out, denom_out, inter_acc,
                         denom_acc, *, n, tile_n, tiles_per_split,
                         mask_possible):
    """Accumulate per-row intersection and (pred_sum + target_sum)."""
    s = pl.program_id(0)          # spatial split (parallel; v7x megacore)
    k = pl.program_id(2)          # spatial tile within the split (reduction)

    @pl.when(k == 0)
    def _():
        inter_acc[...] = jnp.zeros_like(inter_acc)
        denom_acc[...] = jnp.zeros_like(denom_acc)

    # Stream native-dtype tiles; cast to f32 only in-register.
    p = jax.nn.sigmoid(p_ref[...].astype(jnp.float32))
    t = t_ref[...].astype(jnp.float32)

    g = s * tiles_per_split + k   # global spatial tile index

    if mask_possible:
        needs_mask = (g + 1) * tile_n > n

        @pl.when(jnp.logical_not(needs_mask))
        def _():
            inter_acc[...] += jnp.sum(p * t, axis=-1, keepdims=True)
            denom_acc[...] += jnp.sum(p + t, axis=-1, keepdims=True)

        @pl.when(needs_mask)
        def _():
            # Ragged tail (or fully out-of-range ghost tile of an uneven
            # split whose index_map was clamped): zero invalid lanes.
            lane = jax.lax.broadcasted_iota(jnp.int32, p.shape, dimension=1)
            valid = (g * tile_n + lane) < n
            pm = jnp.where(valid, p, 0.0)
            tm = jnp.where(valid, t, 0.0)
            inter_acc[...] += jnp.sum(pm * tm, axis=-1, keepdims=True)
            denom_acc[...] += jnp.sum(pm + tm, axis=-1, keepdims=True)
    else:
        inter_acc[...] += jnp.sum(p * t, axis=-1, keepdims=True)
        denom_acc[...] += jnp.sum(p + t, axis=-1, keepdims=True)

    @pl.when(k == tiles_per_split - 1)
    def _():
        inter_out[...] = inter_acc[...].reshape(inter_out.shape)
        denom_out[...] = denom_acc[...].reshape(denom_out.shape)


def _vmem_capacity_bytes():
    try:
        return int(pltpu.get_tpu_info().vmem_capacity_bytes)
    except Exception:
        return 64 * 1024 * 1024   # most restrictive generation (v7x per-TC)


def _padded_sublanes(rows, itemsize):
    # VMEM pads the sublane axis to the dtype's native tile height
    # (8 for 32-bit, 16 for bf16, 32 for int8/bool).
    native = 8 * max(1, 4 // max(1, itemsize))
    return pl.cdiv(rows, native) * native


def multiclass_dice_loss(predictions, targets, *, smooth=1e-6,
                         class_weights=None, reduction="mean", tile_n=None):
    """Pallas TPU implementation of MultiClassDiceLoss.forward.

    predictions: [B, C, D, H, W] logits (f32 / bf16 / ...).
    targets:     [B, C, D, H, W] binary masks; may use a narrower dtype than
                 predictions (e.g. int8 / bool) - values are cast to f32
                 in-register inside the kernel, so narrow targets directly cut
                 HBM traffic on this bandwidth-bound kernel.
    """
    B, C = predictions.shape[0], predictions.shape[1]
    n = math.prod(predictions.shape[2:])
    BC = B * C

    p_flat = predictions.reshape(BC, n)    # views, no copies / dtype casts
    t_flat = targets.reshape(BC, n)
    p_item = p_flat.dtype.itemsize
    t_item = t_flat.dtype.itemsize

    # --- Row (sublane) blocking -------------------------------------------
    # Full B*C when small (block dim == full array dim satisfies the sublane
    # rule); otherwise a multiple of 8 matched to the narrowest input dtype's
    # native sublane packing (8 f32 / 16 bf16 / 32 int8).
    if BC <= 8:
        row_block = BC
    else:
        row_block = 8 * max(1, 4 // max(1, min(p_item, t_item)))
    num_row_blocks = pl.cdiv(BC, row_block)

    # --- Lane (spatial) tiling: fill a generation-aware VMEM budget --------
    vmem_cap = _vmem_capacity_bytes()
    # Budget for the double-buffered (pred, target) input tiles: half of VMEM,
    # capped at 40 MiB so we stay safe on v7x's 64 MiB even if the capacity
    # query reports per-chip rather than per-core numbers.
    input_budget = min(40 * 1024 * 1024, max(16 * 1024 * 1024, vmem_cap // 2))
    bytes_per_lane = (_padded_sublanes(row_block, p_item) * p_item
                      + _padded_sublanes(row_block, t_item) * t_item)
    max_tile_n = max(128, (input_budget // (2 * bytes_per_lane)) // 128 * 128)
    n_lanes = pl.cdiv(n, 128) * 128
    if tile_n is None:
        tile_n = max_tile_n
    tile_n = max(128, min((tile_n // 128) * 128, max_tile_n, n_lanes))

    tiles_total = pl.cdiv(n, tile_n)

    # --- Spatial split across the megacore when B*C gives one row block ----
    num_splits = 2 if (num_row_blocks == 1 and tiles_total >= 2) else 1
    tiles_per_split = pl.cdiv(tiles_total, num_splits)
    mask_possible = (n % tile_n != 0) or (num_splits * tiles_per_split != tiles_total)

    if num_splits * tiles_per_split != tiles_total:
        # Uneven split: the last split iterates over "ghost" tiles.  Clamp
        # their block index to the last real tile (data stays in-bounds; the
        # ghost tile's contribution is fully masked inside the kernel).
        def in_map(s_i, r_i, k_i):
            return (r_i, jnp.minimum(s_i * tiles_per_split + k_i,
                                     tiles_total - 1))
    else:
        def in_map(s_i, r_i, k_i):
            return (r_i, s_i * tiles_per_split + k_i)

    out_map = lambda s_i, r_i, k_i: (s_i, r_i, 0)

    kernel = functools.partial(_dice_partial_kernel, n=n, tile_n=tile_n,
                               tiles_per_split=tiles_per_split,
                               mask_possible=mask_possible)

    vmem_limit = max(32 * 1024 * 1024,
                     int(min(vmem_cap - 8 * 1024 * 1024,
                             input_budget + 16 * 1024 * 1024)))

    cost = pl.CostEstimate(
        flops=3 * BC * n,
        transcendentals=BC * n,
        bytes_accessed=(p_flat.size * p_item + t_flat.size * t_item
                        + 2 * num_splits * BC * 4),
    )

    inter_part, denom_part = pl.pallas_call(
        kernel,
        out_shape=(jax.ShapeDtypeStruct((num_splits, BC, 1), jnp.float32),
                   jax.ShapeDtypeStruct((num_splits, BC, 1), jnp.float32)),
        grid_spec=pltpu.PrefetchScalarGridSpec(
            num_scalar_prefetch=0,
            grid=(num_splits, num_row_blocks, tiles_per_split),
            in_specs=[
                pl.BlockSpec((row_block, tile_n), in_map),
                pl.BlockSpec((row_block, tile_n), in_map),
            ],
            out_specs=[
                pl.BlockSpec((1, row_block, 1), out_map),
                pl.BlockSpec((1, row_block, 1), out_map),
            ],
            scratch_shapes=[
                pltpu.VMEM((row_block, 1), jnp.float32),
                pltpu.VMEM((row_block, 1), jnp.float32),
            ],
        ),
        compiler_params=pltpu.CompilerParams(
            dimension_semantics=("parallel", "parallel", "arbitrary"),
            vmem_limit_bytes=vmem_limit,
        ),
        cost_estimate=cost,
    )(p_flat, t_flat)

    # Tiny [B, C] tail in plain JAX (dice, class weights, reduction) - matches
    # the PyTorch module semantics exactly.
    inter = inter_part.sum(axis=0).reshape(B, C)
    denom = denom_part.sum(axis=0).reshape(B, C)
    dice = (2.0 * inter + smooth) / (denom + smooth)
    per_class = 1.0 - dice

    if class_weights is not None:
        w = jnp.asarray(class_weights, dtype=jnp.float32)
        per_class = per_class * w[None, :]

    if reduction == "mean":
        return per_class.mean()
    elif reduction == "sum":
        return per_class.sum()
    return per_class


def _reference_dice_loss(predictions, targets, *, smooth=1e-6,
                         class_weights=None, reduction="mean"):
    p = jax.nn.sigmoid(predictions.astype(jnp.float32))
    t = targets.astype(jnp.float32)
    B, C = p.shape[0], p.shape[1]
    pf = p.reshape(B, C, -1)
    tf = t.reshape(B, C, -1)
    inter = (pf * tf).sum(axis=2)
    psum = pf.sum(axis=2)
    tsum = tf.sum(axis=2)
    dice = (2 * inter + smooth) / (psum + tsum + smooth)
    loss = 1 - dice
    if class_weights is not None:
        loss = loss * jnp.asarray(class_weights, jnp.float32)[None, :]
    if reduction == "mean":
        return loss.mean()
    elif reduction == "sum":
        return loss.sum()
    return loss


if __name__ == "__main__":
    key = jax.random.PRNGKey(0)
    k1, k2, k3, k4, k5, k6 = jax.random.split(key, 6)

    # Case 1: spec layout [B, 2, D, H, W] (artery / vein), f32, weighted mean.
    B, C, D, H, W = 2, 2, 4, 16, 16
    preds = jax.random.normal(k1, (B, C, D, H, W), dtype=jnp.float32)
    tgts = (jax.random.uniform(k2, (B, C, D, H, W)) > 0.5).astype(jnp.float32)
    cw = [0.6, 1.4]
    out = multiclass_dice_loss(preds, tgts, class_weights=cw, reduction="mean")
    out = jax.block_until_ready(out)
    ref = _reference_dice_loss(preds, tgts, class_weights=cw, reduction="mean")
    assert jnp.allclose(out, ref, atol=1e-5, rtol=1e-5), (out, ref)

    # Case 2: ragged spatial size + forced small tile -> two spatial splits
    # (megacore path) with in-kernel tail masking on the last tile only.
    preds2 = jax.random.normal(k3, (2, 2, 3, 7, 11), dtype=jnp.float32)
    tgts2 = (jax.random.uniform(k4, (2, 2, 3, 7, 11)) > 0.5).astype(jnp.float32)
    out2 = multiclass_dice_loss(preds2, tgts2, reduction="none", tile_n=128)
    out2 = jax.block_until_ready(out2)
    ref2 = _reference_dice_loss(preds2, tgts2, reduction="none")
    assert jnp.allclose(out2, ref2, atol=1e-5, rtol=1e-5), (out2, ref2)

    # Case 3: bf16 logits/targets streamed natively; accumulation stays f32.
    out3 = multiclass_dice_loss(preds.astype(jnp.bfloat16),
                                tgts.astype(jnp.bfloat16), reduction="sum")
    out3 = jax.block_until_ready(out3)
    ref3 = _reference_dice_loss(preds.astype(jnp.bfloat16),
                                tgts.astype(jnp.bfloat16), reduction="sum")
    assert jnp.allclose(out3, ref3, atol=2e-2, rtol=2e-2), (out3, ref3)

    # Case 4: odd tile count (3 tiles over 2 splits) -> exercises the clamped
    # ghost-tile path of the uneven megacore split.
    preds4 = jax.random.normal(k5, (1, 2, 3, 8, 16), dtype=jnp.float32)
    tgts4 = (jax.random.uniform(k6, (1, 2, 3, 8, 16)) > 0.5).astype(jnp.float32)
    out4 = multiclass_dice_loss(preds4, tgts4, reduction="mean", tile_n=128)
    out4 = jax.block_until_ready(out4)
    ref4 = _reference_dice_loss(preds4, tgts4, reduction="mean")
    assert jnp.allclose(out4, ref4, atol=1e-5, rtol=1e-5), (out4, ref4)

    print("KERNEL_OK")
</pallas_src>

<mosaic_0001>
module attributes {stable_mosaic.version = 11 : i64} {
  func.func @_dice_partial_kernel(%arg0: i32, %arg1: i32, %arg2: i32, %arg3: memref<4x1024xf32, #tpu.memory_space<vmem>>, %arg4: memref<4x1024xf32, #tpu.memory_space<vmem>>, %arg5: memref<1x4x1xf32, #tpu.memory_space<vmem>>, %arg6: memref<1x4x1xf32, #tpu.memory_space<vmem>>, %arg7: memref<4x1xf32, #tpu.memory_space<vmem>>, %arg8: memref<4x1xf32, #tpu.memory_space<vmem>>) attributes {dimension_semantics = [#tpu.dimension_semantics<parallel>, #tpu.dimension_semantics<parallel>, #tpu.dimension_semantics<arbitrary>], iteration_bounds = array<i64: 1, 1, 1>, scalar_prefetch = 0 : i64, scratch_operands = 2 : i64, tpu.core_type = #tpu.core_type<tc>, window_params = [{transform_indices = @transform_0, window_bounds = array<i64: 4, 1024>}, {transform_indices = @transform_1, window_bounds = array<i64: 4, 1024>}, {transform_indices = @transform_2, window_bounds = array<i64: 1, 4, 1>}, {transform_indices = @transform_3, window_bounds = array<i64: 1, 4, 1>}]} {
    %c0_i32 = arith.constant 0 : i32
    %0 = arith.cmpi eq, %arg2, %c0_i32 : i32
    %1 = arith.extui %0 : i1 to i32
    %c0_i32_0 = arith.constant 0 : i32
    %2 = arith.cmpi ne, %1, %c0_i32_0 : i32
    scf.if %2 {
      %cst_16 = arith.constant 0.000000e+00 : f32
      %25 = vector.broadcast %cst_16 : f32 to vector<4x1xf32>
      %c0_17 = arith.constant 0 : index
      %c0_18 = arith.constant 0 : index
      %26 = vector.load %arg7[%c0_17, %c0_18] : memref<4x1xf32, #tpu.memory_space<vmem>>, vector<4x1xf32>
      tpu.vector_store %arg7[%c0_17, %c0_18], %25 {strides = array<i32>} : memref<4x1xf32, #tpu.memory_space<vmem>>, vector<4x1xf32>,
      %cst_19 = arith.constant 0.000000e+00 : f32
      %27 = vector.broadcast %cst_19 : f32 to vector<4x1xf32>
      %c0_20 = arith.constant 0 : index
      %c0_21 = arith.constant 0 : index
      %28 = vector.load %arg8[%c0_20, %c0_21] : memref<4x1xf32, #tpu.memory_space<vmem>>, vector<4x1xf32>
      tpu.vector_store %arg8[%c0_20, %c0_21], %27 {strides = array<i32>} : memref<4x1xf32, #tpu.memory_space<vmem>>, vector<4x1xf32>,
    } else {
    }
    %c0 = arith.constant 0 : index
    %c0_1 = arith.constant 0 : index
    %3 = vector.load %arg3[%c0, %c0_1] : memref<4x1024xf32, #tpu.memory_space<vmem>>, vector<4x1024xf32>
    %4 = arith.negf %3 : vector<4x1024xf32>
    %5 = math.exp %4 : vector<4x1024xf32>
    %cst = arith.constant 1.000000e+00 : f32
    %6 = vector.broadcast %cst : f32 to vector<4x1024xf32>
    %7 = arith.addf %6, %5 : vector<4x1024xf32>
    %8 = arith.divf %6, %7 : vector<4x1024xf32>
    %c0_2 = arith.constant 0 : index
    %c0_3 = arith.constant 0 : index
    %9 = vector.load %arg4[%c0_2, %c0_3] : memref<4x1024xf32, #tpu.memory_space<vmem>>, vector<4x1024xf32>
    %c0_4 = arith.constant 0 : index
    %c0_5 = arith.constant 0 : index
    %10 = vector.load %arg7[%c0_4, %c0_5] : memref<4x1xf32, #tpu.memory_space<vmem>>, vector<4x1xf32>
    %11 = arith.mulf %8, %9 : vector<4x1024xf32>
    %cst_6 = arith.constant dense<0.000000e+00> : vector<4xf32>
    %12 = vector.multi_reduction <add>, %11, %cst_6 [1] : vector<4x1024xf32> to vector<4xf32>
    %13 = vector.shape_cast %12 : vector<4xf32> to vector<4x1xf32>
    %14 = arith.addf %10, %13 : vector<4x1xf32>
    %c0_7 = arith.constant 0 : index
    %c0_8 = arith.constant 0 : index
    %15 = vector.load %arg7[%c0_7, %c0_8] : memref<4x1xf32, #tpu.memory_space<vmem>>, vector<4x1xf32>
    tpu.vector_store %arg7[%c0_7, %c0_8], %14 {strides = array<i32>} : memref<4x1xf32, #tpu.memory_space<vmem>>, vector<4x1xf32>,
    %c0_9 = arith.constant 0 : index
    %c0_10 = arith.constant 0 : index
    %16 = vector.load %arg8[%c0_9, %c0_10] : memref<4x1xf32, #tpu.memory_space<vmem>>, vector<4x1xf32>
    %17 = arith.addf %8, %9 : vector<4x1024xf32>
    %cst_11 = arith.constant dense<0.000000e+00> : vector<4xf32>
    %18 = vector.multi_reduction <add>, %17, %cst_11 [1] : vector<4x1024xf32> to vector<4xf32>
    %19 = vector.shape_cast %18 : vector<4xf32> to vector<4x1xf32>
    %20 = arith.addf %16, %19 : vector<4x1xf32>
    %c0_12 = arith.constant 0 : index
    %c0_13 = arith.constant 0 : index
    %21 = vector.load %arg8[%c0_12, %c0_13] : memref<4x1xf32, #tpu.memory_space<vmem>>, vector<4x1xf32>
    tpu.vector_store %arg8[%c0_12, %c0_13], %20 {strides = array<i32>} : memref<4x1xf32, #tpu.memory_space<vmem>>, vector<4x1xf32>,
    %c0_i32_14 = arith.constant 0 : i32
    %22 = arith.cmpi eq, %arg2, %c0_i32_14 : i32
    %23 = arith.extui %22 : i1 to i32
    %c0_i32_15 = arith.constant 0 : i32
    %24 = arith.cmpi ne, %23, %c0_i32_15 : i32
    scf.if %24 {
      %c0_16 = arith.constant 0 : index
      %c0_17 = arith.constant 0 : index
      %25 = vector.load %arg7[%c0_16, %c0_17] : memref<4x1xf32, #tpu.memory_space<vmem>>, vector<4x1xf32>
      %26 = vector.shape_cast %25 : vector<4x1xf32> to vector<1x4x1xf32>
      %c0_18 = arith.constant 0 : index
      %c0_19 = arith.constant 0 : index
      %c0_20 = arith.constant 0 : index
      %27 = vector.load %arg5[%c0_18, %c0_19, %c0_20] : memref<1x4x1xf32, #tpu.memory_space<vmem>>, vector<1x4x1xf32>
      tpu.vector_store %arg5[%c0_18, %c0_19, %c0_20], %26 {strides = array<i32>} : memref<1x4x1xf32, #tpu.memory_space<vmem>>, vector<1x4x1xf32>,
      %c0_21 = arith.constant 0 : index
      %c0_22 = arith.constant 0 : index
      %28 = vector.load %arg8[%c0_21, %c0_22] : memref<4x1xf32, #tpu.memory_space<vmem>>, vector<4x1xf32>
      %29 = vector.shape_cast %28 : vector<4x1xf32> to vector<1x4x1xf32>
      %c0_23 = arith.constant 0 : index
      %c0_24 = arith.constant 0 : index
      %c0_25 = arith.constant 0 : index
      %30 = vector.load %arg6[%c0_23, %c0_24, %c0_25] : memref<1x4x1xf32, #tpu.memory_space<vmem>>, vector<1x4x1xf32>
      tpu.vector_store %arg6[%c0_23, %c0_24, %c0_25], %29 {strides = array<i32>} : memref<1x4x1xf32, #tpu.memory_space<vmem>>, vector<1x4x1xf32>,
    } else {
    }
    return
  }
  func.func @transform_0(%arg0: i32, %arg1: i32, %arg2: i32) -> (i32, i32) {
    %c1_i32 = arith.constant 1 : i32
    %0 = arith.muli %arg0, %c1_i32 : i32
    %1 = arith.addi %0, %arg2 : i32
    %c0_i32 = arith.constant 0 : i32
    return %arg1, %1 : i32, i32
  }
  func.func @transform_1(%arg0: i32, %arg1: i32, %arg2: i32) -> (i32, i32) {
    %c1_i32 = arith.constant 1 : i32
    %0 = arith.muli %arg0, %c1_i32 : i32
    %1 = arith.addi %0, %arg2 : i32
    %c0_i32 = arith.constant 0 : i32
    return %arg1, %1 : i32, i32
  }
  func.func @transform_2(%arg0: i32, %arg1: i32, %arg2: i32) -> (i32, i32, i32) {
    %c0_i32 = arith.constant 0 : i32
    %c0_i32_0 = arith.constant 0 : i32
    return %arg0, %arg1, %c0_i32 : i32, i32, i32
  }
  func.func @transform_3(%arg0: i32, %arg1: i32, %arg2: i32) -> (i32, i32, i32) {
    %c0_i32 = arith.constant 0 : i32
    %c0_i32_0 = arith.constant 0 : i32
    return %arg0, %arg1, %c0_i32 : i32, i32, i32
  }
}

</mosaic_0001>

<llo_original>
// kernel: tpu_custom_call.1
$region0: #{tpu_custom_call.1}
  #allocation0 [shape = 'u32[]', space=smem, size = 0x4, offset = 0x4, fixed_abs, tag = 'smem constant byte address 0x4 - core index']
  #allocation1 [shape = 'u32[72,128]{1,0:T(1,128)}', space=vmem, size = 0x9000, scoped, tag = 'internal scratch']
  #allocation2 [shape = 'f32[4,1]{1,0:T(4,128)}', space=vmem, size = 0x800, scoped, tag = 'scratch operand']
  #allocation3 [shape = 'f32[4,1]{1,0:T(4,128)}', space=vmem, size = 0x800, scoped, tag = 'scratch operand']
  %s0 = inlined_call_operand.hbm [shape: f32[4,1024], index: 0, kind: input, shape index: {}]
  %s1 = inlined_call_operand.hbm [shape: f32[4,1024], index: 1, kind: input, shape index: {}]
  %s2 = inlined_call_operand.vmem [shape: f32[1,4,1], index: 2, kind: output, shape index: {0}]
  %s3 = inlined_call_operand.vmem [shape: f32[1,4,1], index: 3, kind: output, shape index: {1}]
  %4 = xla_tuple %s2, %s3
  %s5 = sld [smem:[#allocation0]]
  $region42: #{tpu_custom_call.1} parent=0
    _
  %s7 = ssub.s32 1, %s5
  %s8 = scalar_select 0, %s7, %s5
  $region1: #{tpu_custom_call.1} parent=0
    #allocation4 [shape = 'u8[16384]{0}', space=vmem, size = 0x4000, scoped, tag = 'input window, operand 0, single buffered']
    #allocation5 [shape = 's32[1]{0}', space=sflag, size = 0x4, scoped, tag = 'scoped memory for tpu_custom_call.1']
    #allocation6 [shape = 'u8[16384]{0}', space=vmem, size = 0x4000, scoped, tag = 'input window, operand 1, single buffered']
    #allocation7 [shape = 's32[1]{0}', space=sflag, size = 0x4, scoped, tag = 'scoped memory for tpu_custom_call.1']
    %9 = vsyncpa [#allocation5], 0
    %10 = vsyncpa [#allocation7], 0
    // Predicated region
    $region2: #{tpu_custom_call.1} parent=1 // pred_check
      _
    $region3: #{tpu_custom_call.1} parent=1 // pred_check_branch
      %12 = sbr.rel (0) target = $region5
    $region4: #{tpu_custom_call.1} parent=1 // pred_region
      %s13 = sadd.s32 0, 0
      %s14 = smul.u32 8, %s13
      %16 = vsyncadd [#allocation5], 0
      %s17 = smul.addr %s14, 4
      %s18 = scalar_lea.hbm %s0, %s17
      %s20 = sshll.u32 %s18, 4
      %s21 = int_to_ptr.hbm [resolvable:$true] %s20
      %s22 = sshll.u32 [#allocation4], 4
      %s23 = int_to_ptr.vmem [resolvable:$true] %s22
      %25 = dma.hbm_to_vmem [thread:$0]  %s21, 512, %s23, [#allocation5]
    $region5: #{tpu_custom_call.1} parent=1 // pred_fallthru
      _
    // Predicated region
    $region6: #{tpu_custom_call.1} parent=1 // pred_check
      _
    $region7: #{tpu_custom_call.1} parent=1 // pred_check_branch
      %27 = sbr.rel (0) target = $region9
    $region8: #{tpu_custom_call.1} parent=1 // pred_region
      %s28 = sadd.s32 0, 0
      %s29 = smul.u32 8, %s28
      %31 = vsyncadd [#allocation7], 0
      %s32 = smul.addr %s29, 4
      %s33 = scalar_lea.hbm %s1, %s32
      %s35 = sshll.u32 %s33, 4
      %s36 = int_to_ptr.hbm [resolvable:$true] %s35
      %s37 = sshll.u32 [#allocation6], 4
      %s38 = int_to_ptr.vmem [resolvable:$true] %s37
      %40 = dma.hbm_to_vmem [thread:$0]  %s36, 512, %s38, [#allocation7]
    $region9: #{tpu_custom_call.1} parent=1 // pred_fallthru
      _
    // Predicated region
    $region10: #{tpu_custom_call.1} parent=1 // pred_check
      _
    $region11: #{tpu_custom_call.1} parent=1 // pred_check_branch
      %42 = sbr.rel (0) target = $region13
    $region12: #{tpu_custom_call.1} parent=1 // pred_region
      %44 = dma.done [#allocation5], 512
    $region13: #{tpu_custom_call.1} parent=1 // pred_fallthru
      _
    // Predicated region
    $region14: #{tpu_custom_call.1} parent=1 // pred_check
      _
    $region15: #{tpu_custom_call.1} parent=1 // pred_check_branch
      %46 = sbr.rel (0) target = $region17
    $region16: #{tpu_custom_call.1} parent=1 // pred_region
      %48 = dma.done [#allocation7], 512
    $region17: #{tpu_custom_call.1} parent=1 // pred_fallthru
      _
    %s49 = sadd.s32 0, 0
    %s50 = smul.u32 8, %s49
    %s51 = sadd.s32 0, 0
    %s52 = smul.u32 8, %s51
    %p53 = scmp.eq.s32.totalorder 0, 0
    // Predicated region
    $region18: #{tpu_custom_call.1} parent=1 // pred_check
      %p54 = pneg %p53
    $region19: #{tpu_custom_call.1} parent=1 // pred_check_branch
      %56 = sbr.rel (%p54) target = $region21
    $region20: #{tpu_custom_call.1} parent=1 // pred_region
      %vm57 = vcmask 3072
      %58 = vst.msk [vmem:[#allocation2] sm:$0xf] %vm57, 0.0
      %59 = vst.msk [vmem:[#allocation3] sm:$0xf] %vm57, 0.0
    $region21: #{tpu_custom_call.1} parent=1 // pred_fallthru
      _
    %v60 = vld [vmem:[#allocation4] sm:$0xff]
    %v61 = vld [vmem:[#allocation4 + $0x8] sm:$0xff]
    %v62 = vld [vmem:[#allocation4 + $0x10] sm:$0xff]
    %v63 = vld [vmem:[#allocation4 + $0x18] sm:$0xff]
    %v64 = vxor.u32 %v60, 2147483648
    %v65 = vxor.u32 %v61, 2147483648
    %v66 = vxor.u32 %v62, 2147483648
    %v67 = vxor.u32 %v63, 2147483648
    %v68 = vmul.f32 %v64, 1.442695
    %v69 = vpow.pop %v68
    %v70 = vmul.f32 %v65, 1.442695
    %v71 = vpow.pop %v70
    %v72 = vmul.f32 %v66, 1.442695
    %v73 = vpow.pop %v72
    %v74 = vmul.f32 %v67, 1.442695
    %v75 = vpow.pop %v74
    %v76 = vadd.f32 %v69, 1.0
    %v77 = vadd.f32 %v71, 1.0
    %v78 = vadd.f32 %v73, 1.0
    %v79 = vadd.f32 %v75, 1.0
    %v80 = vrcp.pop %v76
    %v81 = vmul.f32 %v76, %v80
    %v82 = vsub.f32 1.0, %v81
    %v83 = vmul.f32 %v80, %v82
    %v84 = vadd.f32 %v80, %v83
    %vm85 = vweird.f32 %v76
    %vm86 = vweird.f32 %v80
    %vm87 = vmor %vm85, %vm86
    %v88 = vsel %vm87, %v80, %v84
    %v89 = vand.u32 2147483647, %v76
    %vm90 = vcmp.eq.f32.partialorder %v89, 8.507059e+37
    %v91 = vand.u32 %v76, 2147483648
    %v92 = vor.u32 1.1754944e-38, %v91
    %v93 = vsel %vm90, %v92, %v88
    %v94 = vmul.f32 1.0, %v93
    %v95 = vrcp.pop %v77
    %v96 = vmul.f32 %v77, %v95
    %v97 = vsub.f32 1.0, %v96
    %v98 = vmul.f32 %v95, %v97
    %v99 = vadd.f32 %v95, %v98
    %vm100 = vweird.f32 %v77
    %vm101 = vweird.f32 %v95
    %vm102 = vmor %vm100, %vm101
    %v103 = vsel %vm102, %v95, %v99
    %v104 = vand.u32 2147483647, %v77
    %vm105 = vcmp.eq.f32.partialorder %v104, 8.507059e+37
    %v106 = vand.u32 %v77, 2147483648
    %v107 = vor.u32 1.1754944e-38, %v106
    %v108 = vsel %vm105, %v107, %v103
    %v109 = vmul.f32 1.0, %v108
    %v110 = vrcp.pop %v78
    %v111 = vmul.f32 %v78, %v110
    %v112 = vsub.f32 1.0, %v111
    %v113 = vmul.f32 %v110, %v112
    %v114 = vadd.f32 %v110, %v113
    %vm115 = vweird.f32 %v78
    %vm116 = vweird.f32 %v110
    %vm117 = vmor %vm115, %vm116
    %v118 = vsel %vm117, %v110, %v114
    %v119 = vand.u32 2147483647, %v78
    %vm120 = vcmp.eq.f32.partialorder %v119, 8.507059e+37
    %v121 = vand.u32 %v78, 2147483648
    %v122 = vor.u32 1.1754944e-38, %v121
    %v123 = vsel %vm120, %v122, %v118
    %v124 = vmul.f32 1.0, %v123
    %v125 = vrcp.pop %v79
    %v126 = vmul.f32 %v79, %v125
    %v127 = vsub.f32 1.0, %v126
    %v128 = vmul.f32 %v125, %v127
    %v129 = vadd.f32 %v125, %v128
    %vm130 = vweird.f32 %v79
    %vm131 = vweird.f32 %v125
    %vm132 = vmor %vm130, %vm131
    %v133 = vsel %vm132, %v125, %v129
    %v134 = vand.u32 2147483647, %v79
    %vm135 = vcmp.eq.f32.partialorder %v134, 8.507059e+37
    %v136 = vand.u32 %v79, 2147483648
    %v137 = vor.u32 1.1754944e-38, %v136
    %v138 = vsel %vm135, %v137, %v133
    %v139 = vmul.f32 1.0, %v138
    %v140 = vld [vmem:[#allocation6] sm:$0xff]
    %v141 = vld [vmem:[#allocation6 + $0x8] sm:$0xff]
    %v142 = vld [vmem:[#allocation6 + $0x10] sm:$0xff]
    %v143 = vld [vmem:[#allocation6 + $0x18] sm:$0xff]
    %v144 = vld [vmem:[#allocation2] sm:$0xf]
    %v145 = vmul.f32 %v94, %v140
    %v146 = vmul.f32 %v109, %v141
    %v147 = vmul.f32 %v124, %v142
    %v148 = vmul.f32 %v139, %v143
    %153 = vst [vmem:[#allocation1] ss:$2 sm:$0xff] %v145
    %s154 = scalar_lea.vmem [#allocation1], 16
    %155 = vst [vmem:[%s154] ss:$2 sm:$0xff] %v146
    %s156 = scalar_lea.vmem [#allocation1], 32
    %157 = vst [vmem:[%s156] ss:$2 sm:$0xff] %v147
    %s158 = scalar_lea.vmem [#allocation1], 48
    %159 = vst [vmem:[%s158] ss:$2 sm:$0xff] %v148
    %v160 = vld.sshfl [vmem:[#allocation1] sm:$0xff pattern:$0x75316420]
    %v161 = vld.sshfl [vmem:[#allocation1 + $0x8] sm:$0xff pattern:$0x75316420]
    %v162 = vld.sshfl [vmem:[#allocation1 + $0x10] sm:$0xff pattern:$0x75316420]
    %v163 = vld.sshfl [vmem:[#allocation1 + $0x18] sm:$0xff pattern:$0x75316420]
    %v164 = vld.sshfl [vmem:[#allocation1 + $0x20] sm:$0xff pattern:$0x75316420]
    %v165 = vld.sshfl [vmem:[#allocation1 + $0x28] sm:$0xff pattern:$0x75316420]
    %v166 = vld.sshfl [vmem:[#allocation1 + $0x30] sm:$0xff pattern:$0x75316420]
    %v167 = vld.sshfl [vmem:[#allocation1 + $0x38] sm:$0xff pattern:$0x75316420]
    %vm176 = vcmask 1043456
    %v177 = vsel %vm176, %v160, 0.0
    %v178 = vsel %vm176, %v161, 0.0
    %v179 = vadd.f32 %v177, %v178
    %v180 = vsel %vm176, %v162, 0.0
    %v181 = vadd.f32 %v179, %v180
    %v182 = vsel %vm176, %v163, 0.0
    %v183 = vadd.f32 %v181, %v182
    %v184 = vsel %vm176, %v164, 0.0
    %v185 = vadd.f32 %v183, %v184
    %v186 = vsel %vm176, %v165, 0.0
    %v187 = vadd.f32 %v185, %v186
    %v188 = vsel %vm176, %v166, 0.0
    %v189 = vadd.f32 %v187, %v188
    %v190 = vsel %vm176, %v167, 0.0
    %v191 = vadd.f32 %v189, %v190
    %192 = vadd.xlane.f32.xlu0 %v191
    %v193 = vpop.xlane.xlu0 %192
    %v194 = vadd.f32 %v144, %v193
    %vm195 = vcmask 3072
    %196 = vst.msk [vmem:[#allocation2] sm:$0xf] %vm195, %v194
    %v197 = vld [vmem:[#allocation3] sm:$0xf]
    %v198 = vadd.f32 %v94, %v140
    %v199 = vadd.f32 %v109, %v141
    %v200 = vadd.f32 %v124, %v142
    %v201 = vadd.f32 %v139, %v143
    %206 = vst [vmem:[#allocation1] ss:$2 sm:$0xff] %v198
    %s207 = scalar_lea.vmem [#allocation1], 16
    %208 = vst [vmem:[%s207] ss:$2 sm:$0xff] %v199
    %s209 = scalar_lea.vmem [#allocation1], 32
    %210 = vst [vmem:[%s209] ss:$2 sm:$0xff] %v200
    %s211 = scalar_lea.vmem [#allocation1], 48
    %212 = vst [vmem:[%s211] ss:$2 sm:$0xff] %v201
    %v213 = vld.sshfl [vmem:[#allocation1] sm:$0xff pattern:$0x75316420]
    %v214 = vld.sshfl [vmem:[#allocation1 + $0x8] sm:$0xff pattern:$0x75316420]
    %v215 = vld.sshfl [vmem:[#allocation1 + $0x10] sm:$0xff pattern:$0x75316420]
    %v216 = vld.sshfl [vmem:[#allocation1 + $0x18] sm:$0xff pattern:$0x75316420]
    %v217 = vld.sshfl [vmem:[#allocation1 + $0x20] sm:$0xff pattern:$0x75316420]
    %v218 = vld.sshfl [vmem:[#allocation1 + $0x28] sm:$0xff pattern:$0x75316420]
    %v219 = vld.sshfl [vmem:[#allocation1 + $0x30] sm:$0xff pattern:$0x75316420]
    %v220 = vld.sshfl [vmem:[#allocation1 + $0x38] sm:$0xff pattern:$0x75316420]
    %v229 = vsel %vm176, %v213, 0.0
    %v230 = vsel %vm176, %v214, 0.0
    %v231 = vadd.f32 %v229, %v230
    %v232 = vsel %vm176, %v215, 0.0
    %v233 = vadd.f32 %v231, %v232
    %v234 = vsel %vm176, %v216, 0.0
    %v235 = vadd.f32 %v233, %v234
    %v236 = vsel %vm176, %v217, 0.0
    %v237 = vadd.f32 %v235, %v236
    %v238 = vsel %vm176, %v218, 0.0
    %v239 = vadd.f32 %v237, %v238
    %v240 = vsel %vm176, %v219, 0.0
    %v241 = vadd.f32 %v239, %v240
    %v242 = vsel %vm176, %v220, 0.0
    %v243 = vadd.f32 %v241, %v242
    %244 = vadd.xlane.f32.xlu0 %v243
    %v245 = vpop.xlane.xlu0 %244
    %v246 = vadd.f32 %v197, %v245
    %247 = vst.msk [vmem:[#allocation3] sm:$0xf] %vm195, %v246
    // Predicated region
    $region22: #{tpu_custom_call.1} parent=1 // pred_check
      %p248 = pneg %p53
    $region23: #{tpu_custom_call.1} parent=1 // pred_check_branch
      %250 = sbr.rel (%p248) target = $region25
    $region24: #{tpu_custom_call.1} parent=1 // pred_region
      %v251 = vld [vmem:[#allocation2] sm:$0xf]
      %252 = vst.msk [vmem:[%s2] sm:$0xf] %vm195, %v251
      %v253 = vld [vmem:[#allocation3] sm:$0xf]
      %254 = vst.msk [vmem:[%s3] sm:$0xf] %vm195, %v253
    $region25: #{tpu_custom_call.1} parent=1 // pred_fallthru
      _
    // Predicated region
    $region26: #{tpu_custom_call.1} parent=1 // pred_check
      _
    $region27: #{tpu_custom_call.1} parent=1 // pred_check_branch
      %256 = sbr.rel (0) target = $region29
    $region28: #{tpu_custom_call.1} parent=1 // pred_region
      _
    $region29: #{tpu_custom_call.1} parent=1 // pred_fallthru
      _
    // Predicated region
    $region30: #{tpu_custom_call.1} parent=1 // pred_check
      _
    $region31: #{tpu_custom_call.1} parent=1 // pred_check_branch
      %258 = sbr.rel (0) target = $region33
    $region32: #{tpu_custom_call.1} parent=1 // pred_region
      _
    $region33: #{tpu_custom_call.1} parent=1 // pred_fallthru
      _
    // Predicated region
    $region34: #{tpu_custom_call.1} parent=1 // pred_check
      _
    $region35: #{tpu_custom_call.1} parent=1 // pred_check_branch
      %260 = sbr.rel (0) target = $region37
    $region36: #{tpu_custom_call.1} parent=1 // pred_region
      _
    $region37: #{tpu_custom_call.1} parent=1 // pred_fallthru
      _
    // Predicated region
    $region38: #{tpu_custom_call.1} parent=1 // pred_check
      _
    $region39: #{tpu_custom_call.1} parent=1 // pred_check_branch
      %262 = sbr.rel (0) target = $region41
    $region40: #{tpu_custom_call.1} parent=1 // pred_region
      _
    $region41: #{tpu_custom_call.1} parent=1 // pred_fallthru
      _
    %263 = vsyncpa [#allocation5], 1
    %264 = vsyncpa [#allocation7], 1

</llo_original>
